<compile_context>
chip_gen: v6e
topology: v6e:2x2x1
jax: 0.10.0
libtpu: 0.0.40
codegen_flags: <defaults>
</compile_context>

<pallas_src>
import functools

import jax
import jax.numpy as jnp
from jax.experimental import pallas as pl
from jax.experimental.pallas import tpu as pltpu

BN_EPS = 1e-5


# --------------------------------------------------------------------------
# Pass 1: per-channel sums + Cin x Cin Gram of x, accumulated across the grid.
# --------------------------------------------------------------------------
def _stats_kernel(x_ref, sum_ref, gram_ref, *, hw, tile):
    n = pl.program_id(0)
    t = pl.program_id(1)

    @pl.when((n == 0) & (t == 0))
    def _():
        sum_ref[...] = jnp.zeros_like(sum_ref)
        gram_ref[...] = jnp.zeros_like(gram_ref)

    x = x_ref[...].astype(jnp.float32)                      # (Cin, T)

    # Mask lanes beyond the true spatial extent (partial tail tile).
    if hw % tile != 0:
        lane = jax.lax.broadcasted_iota(jnp.int32, x.shape, dimension=1)
        x = jnp.where(t * tile + lane < hw, x, 0.0)

    cin = x.shape[0]
    sum_ref[...] += jnp.sum(x, axis=1, keepdims=True)       # (Cin, 1)

    # Gram column-by-column on the VPU/XLU (exact f32; Cin is tiny).
    cols = [jnp.sum(x * x[i:i + 1, :], axis=1, keepdims=True) for i in range(cin)]
    gram_ref[...] += jnp.concatenate(cols, axis=1)          # (Cin, Cin)


# --------------------------------------------------------------------------
# Pass 2: fused conv1x1 + folded BN affine, lane-dense (Cout, T) output tiles.
# --------------------------------------------------------------------------
def _apply_kernel(w_ref, b_ref, x_ref, o_ref):
    w = w_ref[...]                                          # (Cout, Cin) f32
    x = x_ref[...].astype(jnp.float32)                      # (Cin, T)
    cout, cin = w.shape
    tlen = x.shape[-1]

    acc = jnp.zeros((cout, tlen), jnp.float32)
    for k in range(cin):                                    # static unroll, Cin small
        acc = acc + w[:, k:k + 1] * x[k:k + 1, :]           # VPU broadcast-FMA
    o_ref[...] = (acc + b_ref[...]).astype(o_ref.dtype)     # single bias add epilogue


# --------------------------------------------------------------------------
# Wrapper
# --------------------------------------------------------------------------
def composite_connection_unit(x, weight, gamma, beta, *, eps=BN_EPS, tile=2048):
    """x: (N, Cin, H, W) NCHW; weight: (Cout, Cin, 1, 1) or (Cout, Cin);
    gamma/beta: (Cout,).  Returns (N, Cout, H, W)."""
    N, Cin, H, W = x.shape
    if weight.ndim == 4:
        weight = weight.reshape(weight.shape[0], weight.shape[1])
    Cout = weight.shape[0]
    HW = H * W

    # Free reshape (contiguous collapse): spatial axis becomes the lane axis.
    x3 = x.reshape(N, Cin, HW)

    # Spatial tile: multiple of 128 lanes (or the full extent when it fits).
    T = HW if HW <= tile else tile
    num_tiles = pl.cdiv(HW, T)
    grid = (N, num_tiles)
    itemsize = jnp.dtype(x.dtype).itemsize

    w32 = weight.astype(jnp.float32)
    g32 = gamma.astype(jnp.float32)
    b32 = beta.astype(jnp.float32)

    # ---- pass 1: batch statistics of x ------------------------------------
    sums, gram = pl.pallas_call(
        functools.partial(_stats_kernel, hw=HW, tile=T),
        grid=grid,
        in_specs=[pl.BlockSpec((None, Cin, T), lambda n, t: (n, 0, t))],
        out_specs=[
            pl.BlockSpec((Cin, 1), lambda n, t: (0, 0)),
            pl.BlockSpec((Cin, Cin), lambda n, t: (0, 0)),
        ],
        out_shape=[
            jax.ShapeDtypeStruct((Cin, 1), jnp.float32),
            jax.ShapeDtypeStruct((Cin, Cin), jnp.float32),
        ],
        compiler_params=pltpu.CompilerParams(
            dimension_semantics=("arbitrary", "arbitrary")),
        cost_estimate=pl.CostEstimate(
            flops=2 * N * HW * Cin * Cin,
            transcendentals=0,
            bytes_accessed=N * HW * Cin * itemsize),
    )(x3)

    # ---- tiny cross-tile math: BN stats of y, fold affine into W and bias --
    m = jnp.float32(N * HW)
    mean_y = (w32 @ sums[:, 0]) / m                          # (Cout,)
    second = jnp.sum((w32 @ gram) * w32, axis=1) / m         # diag(W G W^T)/M
    var_y = jnp.maximum(second - mean_y * mean_y, 0.0)       # biased variance
    scale = g32 * jax.lax.rsqrt(var_y + eps)                 # gamma / std
    w_eff = w32 * scale[:, None]                             # (Cout, Cin)
    bias = (b32 - mean_y * scale).reshape(Cout, 1)           # (Cout, 1)

    # ---- pass 2: fused conv + affine, lane-dense output ---------------------
    out3 = pl.pallas_call(
        _apply_kernel,
        grid=grid,
        in_specs=[
            pl.BlockSpec((Cout, Cin), lambda n, t: (0, 0)),
            pl.BlockSpec((Cout, 1), lambda n, t: (0, 0)),
            pl.BlockSpec((None, Cin, T), lambda n, t: (n, 0, t)),
        ],
        out_specs=pl.BlockSpec((None, Cout, T), lambda n, t: (n, 0, t)),
        out_shape=jax.ShapeDtypeStruct((N, Cout, HW), x.dtype),
        compiler_params=pltpu.CompilerParams(
            dimension_semantics=("parallel", "parallel")),
        cost_estimate=pl.CostEstimate(
            flops=2 * N * HW * Cin * Cout,
            transcendentals=0,
            bytes_accessed=N * HW * (Cin + Cout) * itemsize),
    )(w_eff, bias, x3)

    return out3.reshape(N, Cout, H, W)


# --------------------------------------------------------------------------
# Demo + correctness check
# --------------------------------------------------------------------------
if __name__ == "__main__":
    N, Cin, Cout, H, W = 2, 8, 4, 16, 16

    key = jax.random.PRNGKey(0)
    kx, kw = jax.random.split(key)

    x = jax.random.normal(kx, (N, Cin, H, W), dtype=jnp.float32)
    weight = jax.random.normal(kw, (Cout, Cin, 1, 1), dtype=jnp.float32) * 0.1
    gamma = jnp.ones((Cout,), jnp.float32)
    beta = jnp.zeros((Cout,), jnp.float32)

    def reference(xin):
        w2 = weight.reshape(Cout, Cin)
        y = jnp.einsum("ok,nkhw->nohw", w2, xin,
                       precision=jax.lax.Precision.HIGHEST)
        mean = y.mean(axis=(0, 2, 3), keepdims=True)
        var = ((y - mean) ** 2).mean(axis=(0, 2, 3), keepdims=True)
        return ((y - mean) / jnp.sqrt(var + BN_EPS)
                * gamma.reshape(1, -1, 1, 1) + beta.reshape(1, -1, 1, 1))

    # tile=128 -> multi-tile grid even at this small demo shape.
    out = composite_connection_unit(x, weight, gamma, beta, tile=128)
    out = jax.block_until_ready(out)
    assert out.shape == (N, Cout, H, W)
    assert float(jnp.max(jnp.abs(out - reference(x)))) < 2e-3

    # Non-multiple-of-128 spatial extent exercises the masked tail tile.
    x2 = jax.random.normal(jax.random.PRNGKey(1), (2, Cin, 18, 18), jnp.float32)
    out2 = jax.block_until_ready(
        composite_connection_unit(x2, weight, gamma, beta, tile=128))
    assert float(jnp.max(jnp.abs(out2 - reference(x2)))) < 2e-3

    print("KERNEL_OK")
</pallas_src>

<mosaic_0001>
module attributes {stable_mosaic.version = 11 : i64} {
  func.func @_stats_kernel(%arg0: i32, %arg1: i32, %arg2: memref<1x8x128xf32, #tpu.memory_space<vmem>>, %arg3: memref<8x1xf32, #tpu.memory_space<vmem>>, %arg4: memref<8x8xf32, #tpu.memory_space<vmem>>) attributes {dimension_semantics = [#tpu.dimension_semantics<arbitrary>, #tpu.dimension_semantics<arbitrary>], iteration_bounds = array<i64: 2, 2>, scalar_prefetch = 0 : i64, scratch_operands = 0 : i64, tpu.core_type = #tpu.core_type<tc>, window_params = [{transform_indices = @transform_0, window_bounds = array<i64: 1, 8, 128>}, {pipeline_mode = #tpu.pipeline_mode<synchronous>, transform_indices = @transform_1, window_bounds = array<i64: 8, 1>}, {pipeline_mode = #tpu.pipeline_mode<synchronous>, transform_indices = @transform_2, window_bounds = array<i64: 8, 8>}]} {
    %c0_i32 = arith.constant 0 : i32
    %0 = arith.cmpi eq, %arg0, %c0_i32 : i32
    %c0_i32_0 = arith.constant 0 : i32
    %1 = arith.cmpi eq, %arg1, %c0_i32_0 : i32
    %2 = arith.andi %0, %1 : i1
    %3 = arith.extui %2 : i1 to i32
    %c0_i32_1 = arith.constant 0 : i32
    %4 = arith.cmpi ne, %3, %c0_i32_1 : i32
    scf.if %4 {
      %cst_20 = arith.constant 0.000000e+00 : f32
      %56 = vector.broadcast %cst_20 : f32 to vector<8x1xf32>
      %c0_21 = arith.constant 0 : index
      %c0_22 = arith.constant 0 : index
      %57 = vector.load %arg3[%c0_21, %c0_22] : memref<8x1xf32, #tpu.memory_space<vmem>>, vector<8x1xf32>
      tpu.vector_store %arg3[%c0_21, %c0_22], %56 {strides = array<i32>} : memref<8x1xf32, #tpu.memory_space<vmem>>, vector<8x1xf32>,
      %cst_23 = arith.constant 0.000000e+00 : f32
      %58 = vector.broadcast %cst_23 : f32 to vector<8x8xf32>
      %c0_24 = arith.constant 0 : index
      %c0_25 = arith.constant 0 : index
      %59 = vector.load %arg4[%c0_24, %c0_25] : memref<8x8xf32, #tpu.memory_space<vmem>>, vector<8x8xf32>
      tpu.vector_store %arg4[%c0_24, %c0_25], %58 {strides = array<i32>} : memref<8x8xf32, #tpu.memory_space<vmem>>, vector<8x8xf32>,
    } else {
    }
    %c0 = arith.constant 0 : index
    %c0_2 = arith.constant 0 : index
    %c0_3 = arith.constant 0 : index
    %5 = vector.load %arg2[%c0, %c0_2, %c0_3] : memref<1x8x128xf32, #tpu.memory_space<vmem>>, vector<1x8x128xf32>
    %6 = vector.shape_cast %5 : vector<1x8x128xf32> to vector<8x128xf32>
    %c0_4 = arith.constant 0 : index
    %c0_5 = arith.constant 0 : index
    %7 = vector.load %arg3[%c0_4, %c0_5] : memref<8x1xf32, #tpu.memory_space<vmem>>, vector<8x1xf32>
    %cst = arith.constant dense<0.000000e+00> : vector<8xf32>
    %8 = vector.multi_reduction <add>, %6, %cst [1] : vector<8x128xf32> to vector<8xf32>
    %9 = vector.shape_cast %8 : vector<8xf32> to vector<8x1xf32>
    %10 = arith.addf %7, %9 : vector<8x1xf32>
    %c0_6 = arith.constant 0 : index
    %c0_7 = arith.constant 0 : index
    %11 = vector.load %arg3[%c0_6, %c0_7] : memref<8x1xf32, #tpu.memory_space<vmem>>, vector<8x1xf32>
    tpu.vector_store %arg3[%c0_6, %c0_7], %10 {strides = array<i32>} : memref<8x1xf32, #tpu.memory_space<vmem>>, vector<8x1xf32>,
    %12 = vector.extract_strided_slice %6 {offsets = [0, 0], sizes = [1, 128], strides = [1, 1]} : vector<8x128xf32> to vector<1x128xf32>
    %13 = vector.broadcast %12 : vector<1x128xf32> to vector<8x128xf32>
    %14 = arith.mulf %6, %13 : vector<8x128xf32>
    %cst_8 = arith.constant dense<0.000000e+00> : vector<8xf32>
    %15 = vector.multi_reduction <add>, %14, %cst_8 [1] : vector<8x128xf32> to vector<8xf32>
    %16 = vector.shape_cast %15 : vector<8xf32> to vector<8x1xf32>
    %17 = vector.extract_strided_slice %6 {offsets = [1, 0], sizes = [1, 128], strides = [1, 1]} : vector<8x128xf32> to vector<1x128xf32>
    %18 = vector.broadcast %17 : vector<1x128xf32> to vector<8x128xf32>
    %19 = arith.mulf %6, %18 : vector<8x128xf32>
    %cst_9 = arith.constant dense<0.000000e+00> : vector<8xf32>
    %20 = vector.multi_reduction <add>, %19, %cst_9 [1] : vector<8x128xf32> to vector<8xf32>
    %21 = vector.shape_cast %20 : vector<8xf32> to vector<8x1xf32>
    %22 = vector.extract_strided_slice %6 {offsets = [2, 0], sizes = [1, 128], strides = [1, 1]} : vector<8x128xf32> to vector<1x128xf32>
    %23 = vector.broadcast %22 : vector<1x128xf32> to vector<8x128xf32>
    %24 = arith.mulf %6, %23 : vector<8x128xf32>
    %cst_10 = arith.constant dense<0.000000e+00> : vector<8xf32>
    %25 = vector.multi_reduction <add>, %24, %cst_10 [1] : vector<8x128xf32> to vector<8xf32>
    %26 = vector.shape_cast %25 : vector<8xf32> to vector<8x1xf32>
    %27 = vector.extract_strided_slice %6 {offsets = [3, 0], sizes = [1, 128], strides = [1, 1]} : vector<8x128xf32> to vector<1x128xf32>
    %28 = vector.broadcast %27 : vector<1x128xf32> to vector<8x128xf32>
    %29 = arith.mulf %6, %28 : vector<8x128xf32>
    %cst_11 = arith.constant dense<0.000000e+00> : vector<8xf32>
    %30 = vector.multi_reduction <add>, %29, %cst_11 [1] : vector<8x128xf32> to vector<8xf32>
    %31 = vector.shape_cast %30 : vector<8xf32> to vector<8x1xf32>
    %32 = vector.extract_strided_slice %6 {offsets = [4, 0], sizes = [1, 128], strides = [1, 1]} : vector<8x128xf32> to vector<1x128xf32>
    %33 = vector.broadcast %32 : vector<1x128xf32> to vector<8x128xf32>
    %34 = arith.mulf %6, %33 : vector<8x128xf32>
    %cst_12 = arith.constant dense<0.000000e+00> : vector<8xf32>
    %35 = vector.multi_reduction <add>, %34, %cst_12 [1] : vector<8x128xf32> to vector<8xf32>
    %36 = vector.shape_cast %35 : vector<8xf32> to vector<8x1xf32>
    %37 = vector.extract_strided_slice %6 {offsets = [5, 0], sizes = [1, 128], strides = [1, 1]} : vector<8x128xf32> to vector<1x128xf32>
    %38 = vector.broadcast %37 : vector<1x128xf32> to vector<8x128xf32>
    %39 = arith.mulf %6, %38 : vector<8x128xf32>
    %cst_13 = arith.constant dense<0.000000e+00> : vector<8xf32>
    %40 = vector.multi_reduction <add>, %39, %cst_13 [1] : vector<8x128xf32> to vector<8xf32>
    %41 = vector.shape_cast %40 : vector<8xf32> to vector<8x1xf32>
    %42 = vector.extract_strided_slice %6 {offsets = [6, 0], sizes = [1, 128], strides = [1, 1]} : vector<8x128xf32> to vector<1x128xf32>
    %43 = vector.broadcast %42 : vector<1x128xf32> to vector<8x128xf32>
    %44 = arith.mulf %6, %43 : vector<8x128xf32>
    %cst_14 = arith.constant dense<0.000000e+00> : vector<8xf32>
    %45 = vector.multi_reduction <add>, %44, %cst_14 [1] : vector<8x128xf32> to vector<8xf32>
    %46 = vector.shape_cast %45 : vector<8xf32> to vector<8x1xf32>
    %47 = vector.extract_strided_slice %6 {offsets = [7, 0], sizes = [1, 128], strides = [1, 1]} : vector<8x128xf32> to vector<1x128xf32>
    %48 = vector.broadcast %47 : vector<1x128xf32> to vector<8x128xf32>
    %49 = arith.mulf %6, %48 : vector<8x128xf32>
    %cst_15 = arith.constant dense<0.000000e+00> : vector<8xf32>
    %50 = vector.multi_reduction <add>, %49, %cst_15 [1] : vector<8x128xf32> to vector<8xf32>
    %51 = vector.shape_cast %50 : vector<8xf32> to vector<8x1xf32>
    %c0_16 = arith.constant 0 : index
    %c0_17 = arith.constant 0 : index
    %52 = vector.load %arg4[%c0_16, %c0_17] : memref<8x8xf32, #tpu.memory_space<vmem>>, vector<8x8xf32>
    %53 = tpu.concatenate %16, %21, %26, %31, %36, %41, %46, %51 in 1 : vector<8x1xf32>, vector<8x1xf32>, vector<8x1xf32>, vector<8x1xf32>, vector<8x1xf32>, vector<8x1xf32>, vector<8x1xf32>, vector<8x1xf32> -> vector<8x8xf32>
    %54 = arith.addf %52, %53 : vector<8x8xf32>
    %c0_18 = arith.constant 0 : index
    %c0_19 = arith.constant 0 : index
    %55 = vector.load %arg4[%c0_18, %c0_19] : memref<8x8xf32, #tpu.memory_space<vmem>>, vector<8x8xf32>
    tpu.vector_store %arg4[%c0_18, %c0_19], %54 {strides = array<i32>} : memref<8x8xf32, #tpu.memory_space<vmem>>, vector<8x8xf32>,
    return
  }
  func.func @transform_0(%arg0: i32, %arg1: i32) -> (i32, i32, i32) {
    %c0_i32 = arith.constant 0 : i32
    %c0_i32_0 = arith.constant 0 : i32
    return %arg0, %c0_i32, %arg1 : i32, i32, i32
  }
  func.func @transform_1(%arg0: i32, %arg1: i32) -> (i32, i32) {
    %c0_i32 = arith.constant 0 : i32
    %c0_i32_0 = arith.constant 0 : i32
    %c0_i32_1 = arith.constant 0 : i32
    return %c0_i32, %c0_i32_0 : i32, i32
  }
  func.func @transform_2(%arg0: i32, %arg1: i32) -> (i32, i32) {
    %c0_i32 = arith.constant 0 : i32
    %c0_i32_0 = arith.constant 0 : i32
    %c0_i32_1 = arith.constant 0 : i32
    return %c0_i32, %c0_i32_0 : i32, i32
  }
}

</mosaic_0001>

<llo_original>
// kernel: tpu_custom_call.1
$region0: #{tpu_custom_call.1}
  #allocation0 [shape = 'u32[]', space=smem, size = 0x4, offset = 0x4, fixed_abs, tag = 'smem constant byte address 0x4 - core index']
  #allocation1 [shape = 'u32[144,128]{1,0:T(1,128)}', space=vmem, size = 0x12000, scoped, tag = 'internal scratch']
  %s0 = inlined_call_operand.hbm [shape: f32[2,8,256], index: 0, kind: input, shape index: {}]
  %s1 = inlined_call_operand.vmem [shape: f32[8,1], index: 1, kind: output, shape index: {0}]
  %s2 = inlined_call_operand.hbm [shape: f32[8,8], index: 2, kind: output, shape index: {1}]
  %3 = xla_tuple %s1, %s2
  %s4 = sld [smem:[#allocation0]]
  $region53: #{tpu_custom_call.1} parent=0
    _
  %s6 = ssub.s32 1, %s4
  %s7 = scalar_select 0, %s6, %s4
  $region1: #{tpu_custom_call.1} parent=0
    #allocation2 [shape = 'u8[8192]{0}', space=vmem, size = 0x2000, scoped, tag = 'input window, operand 0']
    #allocation3 [shape = 's32[2]{0}', space=sflag, size = 0x8, scoped, tag = 'scoped memory for tpu_custom_call.1']
    #allocation4 [shape = 's32[2]{0}', space=sflag, size = 0x8, scoped, tag = 'scoped memory for tpu_custom_call.1']
    #allocation5 [shape = 'u8[4096]{0}', space=vmem, size = 0x1000, scoped, tag = 'output window, operand 1, single buffered']
    %8 = vsyncpa [#allocation3], 0
    %s9 = scalar_lea.sflag [#allocation3], 1
    %10 = vsyncpa %s9, 0
    %11 = vsyncpa [#allocation4], 0
    loop: start=0, step=1, limit=6
    $region2: #{tpu_custom_call.1} parent=1 // loop_pre_header
      _
    $region3: #{tpu_custom_call.1} parent=1 // loop_header
      %s13 = sphi 0, %s17
      %p14 = scmp.ge.s32.totalorder %s13, 6
      %s20 = sphi 0, %s32
      %s21 = sphi 0, %s28
      %s22 = sphi 0, %s20
      %s23 = sphi 0, %s21
      %s24 = sphi 0, %s22
      %s25 = sphi 0, %s23
      %s37 = sphi 0, %s39
      %s40 = sphi 0, %s37
      %s41 = sphi 0, %s40
      %s57 = sphi 0, %s41
      %s61 = sphi 0, %s61
      %s63 = sphi 0, %s61
      %s64 = sphi 0, %s63
      %s78 = sphi 0, %s64
      %s82 = sphi 0, %s82
      %s84 = sphi 0, %s82
      %s85 = sphi 0, %s84
      %s99 = sphi 0, %s85
    $region4: #{tpu_custom_call.1} parent=1 // loop_header_branch
      %16 = sbr.rel (%p14) target = $region8
    $region5: #{tpu_custom_call.1} parent=1 // loop_body
      %s18 = ssub.s32 %s13, 1
      %s19 = ssub.s32 %s13, 2
      %s26 = sadd.s32 1, %s21
      %p27 = scmp.ge.s32.totalorder %s26, 2
      %s28 = scalar_select %p27, 0, %s26
      %s29 = sadd.s32 1, %s20
      %s30 = scalar_select %p27, %s29, %s20
      %p31 = scmp.ge.s32.totalorder %s30, 2
      %s32 = scalar_select %p31, 0, %s30
      %s33 = ssub.s32 %s20, %s32
      %s34 = ssub.s32 %s21, %s28
      %s35 = sor.u32 %s33, %s34
      %p36 = scmp.eq.s32.totalorder %s35, 0
      %s38 = sadd.s32 %s37, 1
      %s39 = scalar_select %p36, %s37, %s38
      %p42 = pneg %p36
      %p43 = scmp.eq.s32.totalorder %s13, 3
      %p44 = por %p42, %p43
      %p45 = scmp.ne.s32.totalorder %s37, %s40
      %p46 = scmp.eq.s32.totalorder %s13, 0
      %p47 = por %p45, %p46
      %p48 = scmp.ne.s32.totalorder %s37, %s40
      %p49 = scmp.eq.s32.totalorder %s18, 3
      %p50 = por %p48, %p49
      %p51 = scmp.ne.s32.totalorder %s40, %s41
      %p52 = scmp.eq.s32.totalorder %s18, 0
      %p53 = por %p51, %p52
      %p54 = scmp.ne.s32.totalorder %s40, %s41
      %p55 = scmp.eq.s32.totalorder %s19, 3
      %p56 = por %p54, %p55
      %p58 = scmp.ne.s32.totalorder %s41, %s57
      %p59 = scmp.eq.s32.totalorder %s19, 0
      %p60 = por %p58, %p59
      %s62 = sadd.s32 %s61, 1
      %p65 = scmp.eq.s32.totalorder %s13, 3
      %p66 = scmp.ne.s32.totalorder %s61, %s63
      %p67 = scmp.eq.s32.totalorder %s13, 0
      %p68 = por %p66, %p67
      %p69 = scmp.ne.s32.totalorder %s61, %s63
      %p70 = scmp.eq.s32.totalorder %s18, 3
      %p71 = por %p69, %p70
      %p72 = scmp.ne.s32.totalorder %s63, %s64
      %p73 = scmp.eq.s32.totalorder %s18, 0
      %p74 = por %p72, %p73
      %p75 = scmp.ne.s32.totalorder %s63, %s64
      %p76 = scmp.eq.s32.totalorder %s19, 3
      %p77 = por %p75, %p76
      %p79 = scmp.ne.s32.totalorder %s64, %s78
      %p80 = scmp.eq.s32.totalorder %s19, 0
      %p81 = por %p79, %p80
      %s83 = sadd.s32 %s82, 1
      %p86 = scmp.eq.s32.totalorder %s13, 3
      %p87 = scmp.ne.s32.totalorder %s82, %s84
      %p88 = scmp.eq.s32.totalorder %s13, 0
      %p89 = por %p87, %p88
      %p90 = scmp.ne.s32.totalorder %s82, %s84
      %p91 = scmp.eq.s32.totalorder %s18, 3
      %p92 = por %p90, %p91
      %p93 = scmp.ne.s32.totalorder %s84, %s85
      %p94 = scmp.eq.s32.totalorder %s18, 0
      %p95 = por %p93, %p94
      %p96 = scmp.ne.s32.totalorder %s84, %s85
      %p97 = scmp.eq.s32.totalorder %s19, 3
      %p98 = por %p96, %p97
      %p100 = scmp.ne.s32.totalorder %s85, %s99
      %p101 = scmp.eq.s32.totalorder %s19, 0
      %p102 = por %p100, %p101
      %p103 = scmp.le.s32.totalorder 1, %s13
      %p104 = scmp.lt.s32.totalorder %s13, 5
      %p105 = pnand %p103, %p104
      %p106 = pneg %p105
      // Predicated region
      $region9: #{tpu_custom_call.1} parent=5 // pred_check
        _
      $region10: #{tpu_custom_call.1} parent=5 // pred_check_branch
        %108 = sbr.rel (%p105) target = $region12
      $region11: #{tpu_custom_call.1} parent=5 // pred_region
        %s109 = ssub.s32 %s13, 1
      $region12: #{tpu_custom_call.1} parent=5 // pred_fallthru
        _
      %p110 = scmp.lt.s32.totalorder %s13, 4
      // Predicated region
      $region13: #{tpu_custom_call.1} parent=5 // pred_check
        %p111 = pneg %p110
      $region14: #{tpu_custom_call.1} parent=5 // pred_check_branch
        %113 = sbr.rel (%p111) target = $region16
      $region15: #{tpu_custom_call.1} parent=5 // pred_region
        // Predicated region
        $region17: #{tpu_custom_call.1} parent=15 // pred_check
          %p114 = pneg %p47
        $region18: #{tpu_custom_call.1} parent=15 // pred_check_branch
          %116 = sbr.rel (%p114) target = $region20
        $region19: #{tpu_custom_call.1} parent=15 // pred_region
          %s117 = sand.u32 %s37, 1
          %s118 = scalar_lea.sflag [#allocation3], %s117
          %s119 = sand.u32 %s37, 1
          %s120 = smul.addr %s119, 8
          %s121 = scalar_lea.vmem [#allocation2], %s120
          %s123 = ssub.s32 128, 128
          %124 = vsyncadd %s118, %s123
          %s125 = smul.addr %s20, 2
          %s126 = sadd.s32 %s21, %s125
          %s127 = smul.addr %s126, 128
          %s128 = scalar_lea.hbm %s0, %s127
          %s130 = sshll.u32 %s121, 4
          %s131 = int_to_ptr.vmem [resolvable:$true] %s130
          %133 = dma.hbm_to_vmem [thread:$0]  %s128, 128, %s131, %s118
        $region20: #{tpu_custom_call.1} parent=15 // pred_fallthru
          _
      $region16: #{tpu_custom_call.1} parent=5 // pred_fallthru
        _
      %p134 = scmp.le.s32.totalorder 1, %s13
      %p135 = scmp.lt.s32.totalorder %s13, 5
      %p136 = pnand %p134, %p135
      %p137 = pneg %p136
      // Predicated region
      $region21: #{tpu_custom_call.1} parent=5 // pred_check
        _
      $region22: #{tpu_custom_call.1} parent=5 // pred_check_branch
        %139 = sbr.rel (%p136) target = $region24
      $region23: #{tpu_custom_call.1} parent=5 // pred_region
        %s140 = ssub.s32 %s13, 1
        %s141 = sand.u32 %s40, 1
        %s142 = scalar_lea.sflag [#allocation3], %s141
        %s143 = sand.u32 %s40, 1
        %s144 = smul.addr %s143, 8
        %s145 = scalar_lea.vmem [#allocation2], %s144
        // Predicated region
        $region25: #{tpu_custom_call.1} parent=23 // pred_check
          %p146 = pneg %p53
        $region26: #{tpu_custom_call.1} parent=23 // pred_check_branch
          %148 = sbr.rel (%p146) target = $region28
        $region27: #{tpu_custom_call.1} parent=23 // pred_region
          %149 = dma.done %s142, 128
        $region28: #{tpu_custom_call.1} parent=23 // pred_fallthru
          _
        %s150 = sand.u32 %s40, 1
        %s151 = scalar_lea.sflag [#allocation3], %s150
        %s152 = sand.u32 %s40, 1
        %s153 = smul.addr %s152, 8
        %s154 = scalar_lea.vmem [#allocation2], %s153
        %p155 = pneg %p53
        %p156 = pneg %p50
        %p157 = pneg %p74
        %p158 = pneg %p71
        %p159 = pneg %p95
        %p160 = pneg %p92
        %p161 = scmp.eq.s32.totalorder %s22, 0
        %p162 = scmp.eq.s32.totalorder %s23, 0
        %p163 = pnand %p161, %p162
        %p164 = pneg %p163
        // Predicated region
        $region29: #{tpu_custom_call.1} parent=23 // pred_check
          _
        $region30: #{tpu_custom_call.1} parent=23 // pred_check_branch
          %166 = sbr.rel (%p163) target = $region32
        $region31: #{tpu_custom_call.1} parent=23 // pred_region
          %vm167 = vcmask 7168
          %168 = vst.msk [vmem:[%s1] sm:$0xff] %vm167, 0.0
          %vm169 = vcmask 64512
          %170 = vst.msk [vmem:[#allocation5] sm:$0xff] %vm169, 0.0
        $region32: #{tpu_custom_call.1} parent=23 // pred_fallthru
          _
        %v171 = vld [vmem:[%s145] sm:$0xff]
        %v172 = vld [vmem:[%s1] sm:$0xff]
        %173 = vadd.xlane.f32.xlu0 %v171
        %v174 = vpop.xlane.xlu0 %173
        %v175 = vadd.f32 %v172, %v174
        %vm176 = vcmask 7168
        %177 = vst.msk [vmem:[%s1] sm:$0xff] %vm176, %v175
        %v178 = vlaneseq
        %v179 = vshrl.u32 %v178, 7
        %v180 = vsub.s32 0, %v179
        %v181 = vrot.slane %v171, %v180
        %v182 = vmul.f32 %v171, %v181
        %183 = vadd.xlane.f32.xlu0 %v182
        %v184 = vpop.xlane.xlu0 %183
        %v185 = vlaneseq
        %v186 = vshrl.u32 %v185, 7
        %v187 = vsub.s32 1, %v186
        %v188 = vrot.slane %v171, %v187
        %v189 = vmul.f32 %v171, %v188
        %190 = vadd.xlane.f32.xlu0 %v189
        %v191 = vpop.xlane.xlu0 %190
        %v192 = vlaneseq
        %v193 = vshrl.u32 %v192, 7
        %v194 = vsub.s32 2, %v193
        %v195 = vrot.slane %v171, %v194
        %v196 = vmul.f32 %v171, %v195
        %197 = vadd.xlane.f32.xlu0 %v196
        %v198 = vpop.xlane.xlu0 %197
        %v199 = vlaneseq
        %v200 = vshrl.u32 %v199, 7
        %v201 = vsub.s32 3, %v200
        %v202 = vrot.slane %v171, %v201
        %v203 = vmul.f32 %v171, %v202
        %204 = vadd.xlane.f32.xlu0 %v203
        %v205 = vpop.xlane.xlu0 %204
        %v206 = vlaneseq
        %v207 = vshrl.u32 %v206, 7
        %v208 = vsub.s32 4, %v207
        %v209 = vrot.slane %v171, %v208
        %v210 = vmul.f32 %v171, %v209
        %211 = vadd.xlane.f32.xlu0 %v210
        %v212 = vpop.xlane.xlu0 %211
        %v213 = vlaneseq
        %v214 = vshrl.u32 %v213, 7
        %v215 = vsub.s32 5, %v214
        %v216 = vrot.slane %v171, %v215
        %v217 = vmul.f32 %v171, %v216
        %218 = vadd.xlane.f32.xlu0 %v217
        %v219 = vpop.xlane.xlu0 %218
        %v220 = vlaneseq
        %v221 = vshrl.u32 %v220, 7
        %v222 = vsub.s32 6, %v221
        %v223 = vrot.slane %v171, %v222
        %v224 = vmul.f32 %v171, %v223
        %225 = vadd.xlane.f32.xlu0 %v224
        %v226 = vpop.xlane.xlu0 %225
        %v227 = vlaneseq
        %v228 = vshrl.u32 %v227, 7
        %v229 = vsub.s32 7, %v228
        %v230 = vrot.slane %v171, %v229
        %v231 = vmul.f32 %v171, %v230
        %232 = vadd.xlane.f32.xlu0 %v231
        %v233 = vpop.xlane.xlu0 %232
        %v234 = vld [vmem:[#allocation5] sm:$0xff]
        %v235 = vsel %vm176, %v184, %v191
        %vm236 = vcmask 15360
        %v237 = vsel %vm236, %v235, %v198
        %vm238 = vcmask 23552
        %v239 = vsel %vm238, %v237, %v205
        %vm240 = vcmask 31744
        %v241 = vsel %vm240, %v239, %v212
        %vm242 = vcmask 39936
        %v243 = vsel %vm242, %v241, %v219
        %vm244 = vcmask 48128
        %v245 = vsel %vm244, %v243, %v226
        %vm246 = vcmask 56320
        %v247 = vsel %vm246, %v245, %v233
        %v248 = vadd.f32 %v234, %v247
        %vm249 = vcmask 64512
        %250 = vst.msk [vmem:[#allocation5] sm:$0xff] %vm249, %v248
        // Predicated region
        $region33: #{tpu_custom_call.1} parent=23 // pred_check
          %p251 = pneg %p71
        $region34: #{tpu_custom_call.1} parent=23 // pred_check_branch
          %253 = sbr.rel (%p251) target = $region36
        $region35: #{tpu_custom_call.1} parent=23 // pred_region
          _
        $region36: #{tpu_custom_call.1} parent=23 // pred_fallthru
          _
        // Predicated region
        $region37: #{tpu_custom_call.1} parent=23 // pred_check
          %p254 = pneg %p92
        $region38: #{tpu_custom_call.1} parent=23 // pred_check_branch
          %256 = sbr.rel (%p254) target = $region40
        $region39: #{tpu_custom_call.1} parent=23 // pred_region
          %s258 = ssub.s32 128, 128
          %259 = vsyncadd [#allocation4], %s258
          %s261 = sshll.u32 [#allocation5], 4
          %s262 = int_to_ptr.vmem [resolvable:$true] %s261
          %264 = dma.vmem_to_hbm [thread:$0]  %s262, 128, %s2, [#allocation4]
        $region40: #{tpu_custom_call.1} parent=23 // pred_fallthru
          _
        // Predicated region
        $region41: #{tpu_custom_call.1} parent=23 // pred_check
          %p265 = pneg %p71
        $region42: #{tpu_custom_call.1} parent=23 // pred_check_branch
          %267 = sbr.rel (%p265) target = $region44
        $region43: #{tpu_custom_call.1} parent=23 // pred_region
          _
        $region44: #{tpu_custom_call.1} parent=23 // pred_fallthru
          _
        // Predicated region
        $region45: #{tpu_custom_call.1} parent=23 // pred_check
          %p268 = pneg %p92
        $region46: #{tpu_custom_call.1} parent=23 // pred_check_branch
          %270 = sbr.rel (%p268) target = $region48
        $region47: #{tpu_custom_call.1} parent=23 // pred_region
          %271 = dma.done [#allocation4], 128
        $region48: #{tpu_custom_call.1} parent=23 // pred_fallthru
          _
      $region24: #{tpu_custom_call.1} parent=5 // pred_fallthru
        _
      %p272 = scmp.le.s32.totalorder 2, %s13
      // Predicated region
      $region49: #{tpu_custom_call.1} parent=5 // pred_check
        %p273 = pneg %p272
      $region50: #{tpu_custom_call.1} parent=5 // pred_check_branch
        %275 = sbr.rel (%p273) target = $region52
      $region51: #{tpu_custom_call.1} parent=5 // pred_region
        %s276 = ssub.s32 %s13, 2
      $region52: #{tpu_custom_call.1} parent=5 // pred_fallthru
        _
    $region6: #{tpu_custom_call.1} parent=1 // loop_footer
      %s17 = sadd.s32 1, %s13
    $region7: #{tpu_custom_call.1} parent=1 // loop_footer_branch
      %12 = sbr.rel target = $region3
    $region8: #{tpu_custom_call.1} parent=1 // loop_exit
      _
    %277 = vsyncpa [#allocation3], 1
    %s278 = scalar_lea.sflag [#allocation3], 1
    %279 = vsyncpa %s278, 1
    %280 = vsyncpa [#allocation4], 1
    %s281 = scalar_lea.sflag [#allocation4], 1
    %282 = vsyncpa %s281, 1

</llo_original>
